<compile_context>
chip_gen: v5e
topology: v5e:2x2
jax: 0.10.0
libtpu: 0.0.40
codegen_flags: <defaults>
</compile_context>

<pallas_src>
import jax
import jax.numpy as jnp
from jax.experimental import pallas as pl
from jax.experimental.pallas import tpu as pltpu


def _round_up(x, m):
    return ((x + m - 1) // m) * m


def _proxy_anchor_kernel(x_ref, t_ref, p_ref, bias_ref, out_ref):
    # x_ref:    [TB, Dp] f32   batch tile of embeddings (pipelined)
    # t_ref:    [TB, 1]  i32   labels tile
    # p_ref:    [Cp, Dp] bf16  L2-normalized proxies (resident, single-buffered)
    # bias_ref: [1,  Cp] f32   0 for valid class columns, -1e30 for padding
    # out_ref:  [TB, 1]  f32   per-row loss contribution: lse - cos[row, T[row]]
    x = x_ref[...].astype(jnp.float32)
    t = t_ref[...]

    # l2_norm along the embedding axis (matches the torch helper:
    # x / sqrt(sum(x^2) + 1e-12)); zero-padded embed columns contribute nothing.
    x_norm = x * jax.lax.rsqrt(jnp.sum(x * x, axis=1, keepdims=True) + 1e-12)

    # cos = l2_norm(X) @ l2_norm(P)^T as a direct contraction over the embedding
    # axes (no transpose of P).  bf16 MXU inputs, f32 accumulation.
    cos = jax.lax.dot_general(
        x_norm.astype(jnp.bfloat16),
        p_ref[...],
        dimension_numbers=(((1,), (1,)), ((), ())),
        preferred_element_type=jnp.float32,
    )  # [TB, Cp]

    # Additive mask for padded class columns (one VPU add, no iota/select).
    cos_m = cos + bias_ref[...]

    # Row-wise logsumexp over classes (padded columns vanish under exp).
    m = jnp.max(cos_m, axis=1, keepdims=True)
    lse = jnp.log(jnp.sum(jnp.exp(cos_m - m), axis=1, keepdims=True)) + m

    # Gather cos[i, T[i]] via a lane-iota one-hot; labels are < nb_classes so
    # the additive bias is zero at those columns (cos_m == cos there).
    class_ids = jax.lax.broadcasted_iota(jnp.int32, cos_m.shape, 1)
    tgt = jnp.sum(jnp.where(class_ids == t, cos_m, 0.0), axis=1, keepdims=True)

    out_ref[...] = lse - tgt


def proxy_anchor_linear_loss(X, P, T, *, tile_b=256):
    """X: [B, D] float, P: [C, D] float (proxies.weight), T: [B] int labels."""
    B, D = X.shape
    C, D2 = P.shape
    assert D == D2

    # Lane-dense padding targets: class axis (logits' last dim) and embed axis
    # to multiples of 128; batch padded to a multiple of the batch tile.
    Dp = _round_up(D, 128)
    Cp = _round_up(C, 128)
    TB = min(tile_b, _round_up(B, 8))
    Bp = _round_up(B, TB)

    # Hoisted out of the kernel: normalize P once (f32 math), cast to bf16.
    p32 = P.astype(jnp.float32)
    p_norm = p32 * jax.lax.rsqrt(jnp.sum(p32 * p32, axis=1, keepdims=True) + 1e-12)
    p_bf16 = p_norm.astype(jnp.bfloat16)

    # Conditional padding: skip the HBM copies when shapes are already aligned.
    Xp = X if (Bp == B and Dp == D) else jnp.pad(X, ((0, Bp - B), (0, Dp - D)))
    Pp = p_bf16 if (Cp == C and Dp == D) else jnp.pad(
        p_bf16, ((0, Cp - C), (0, Dp - D))
    )
    T2 = T.reshape(B, 1).astype(jnp.int32)
    if Bp != B:
        T2 = jnp.pad(T2, ((0, Bp - B), (0, 0)))

    # Additive class-padding mask: 0 for valid classes, -1e30 for padded columns.
    bias = (
        jnp.where(jnp.arange(Cp) < C, 0.0, -1e30).astype(jnp.float32).reshape(1, Cp)
    )

    # VMEM budget: resident bf16 P (single buffer) + class bias + double-buffered
    # X tiles + small label/output tiles + a handful of [TB, Cp] f32 softmax
    # temporaries, plus headroom.  Capped at 64 MiB (v7x physical VMEM).
    vmem_bytes = (
        Cp * Dp * 2            # resident P (bf16, single-buffered)
        + Cp * 4               # class bias (single-buffered)
        + 2 * TB * Dp * 4      # X tile, double-buffered
        + 4 * TB * 128 * 4     # label + per-row output tiles (lane-padded)
        + 8 * TB * Cp * 4      # cos / masked / exp / one-hot temporaries
        + (2 << 20)            # headroom
    )
    vmem_limit = int(min(max(vmem_bytes, 16 << 20), 64 << 20))

    per_row = pl.pallas_call(
        _proxy_anchor_kernel,
        out_shape=jax.ShapeDtypeStruct((Bp, 1), jnp.float32),
        grid=(Bp // TB,),
        in_specs=[
            pl.BlockSpec((TB, Dp), lambda i: (i, 0)),      # X tile (pipelined)
            pl.BlockSpec((TB, 1), lambda i: (i, 0)),       # labels tile
            pl.BlockSpec(                                  # full P, resident
                (Cp, Dp), lambda i: (0, 0), pipeline_mode=pl.Buffered(buffer_count=1)
            ),
            pl.BlockSpec(                                  # class-padding bias
                (1, Cp), lambda i: (0, 0), pipeline_mode=pl.Buffered(buffer_count=1)
            ),
        ],
        out_specs=pl.BlockSpec((TB, 1), lambda i: (i, 0)),
        compiler_params=pltpu.CompilerParams(
            dimension_semantics=("parallel",),
            vmem_limit_bytes=vmem_limit,
        ),
    )(Xp, T2, Pp, bias)

    # CrossEntropy mean over the real batch rows (padded rows sliced away).
    return jnp.sum(per_row[:B, 0]) / B


if __name__ == "__main__":
    # Small, module-consistent shapes.
    batch = 8
    sz_embed = 32
    nb_classes = 16

    key = jax.random.PRNGKey(0)
    kx, kp, kt = jax.random.split(key, 3)

    # Deterministic embeddings.
    X = jax.random.normal(kx, (batch, sz_embed), dtype=jnp.float32)

    # proxies = nn.Linear(sz_embed, nb_classes).weight -> [nb_classes, sz_embed]
    # kaiming_normal_(mode='fan_out') => std = sqrt(2 / nb_classes)
    P = jax.random.normal(kp, (nb_classes, sz_embed), dtype=jnp.float32) * jnp.sqrt(
        2.0 / nb_classes
    )

    # Integer class targets.
    T = jax.random.randint(kt, (batch,), 0, nb_classes, dtype=jnp.int32)

    loss = proxy_anchor_linear_loss(X, P, T)
    jax.block_until_ready(loss)

    # Pure-f32 JAX reference (sanity check only).
    def _ref(X, P, T):
        xn = X / jnp.sqrt(jnp.sum(X * X, axis=1, keepdims=True) + 1e-12)
        pn = P / jnp.sqrt(jnp.sum(P * P, axis=1, keepdims=True) + 1e-12)
        cos = xn @ pn.T
        logz = jax.scipy.special.logsumexp(cos, axis=1)
        tgt = cos[jnp.arange(X.shape[0]), T]
        return jnp.mean(logz - tgt)

    ref = _ref(X, P, T)
    # bf16 MXU inputs loosen the match vs the pure-f32 reference (~1e-3 in cos),
    # so the tolerance is relaxed accordingly.
    assert jnp.allclose(loss, ref, atol=5e-2, rtol=5e-2), (loss, ref)

    print("KERNEL_OK")
</pallas_src>

<mosaic_0001>
module attributes {stable_mosaic.version = 11 : i64} {
  func.func @_proxy_anchor_kernel(%arg0: i32, %arg1: memref<8x128xf32, #tpu.memory_space<vmem>>, %arg2: memref<8x1xi32, #tpu.memory_space<vmem>>, %arg3: memref<128x128xbf16, #tpu.memory_space<vmem>>, %arg4: memref<1x128xf32, #tpu.memory_space<vmem>>, %arg5: memref<8x1xf32, #tpu.memory_space<vmem>>) attributes {dimension_semantics = [#tpu.dimension_semantics<parallel>], iteration_bounds = array<i64: 1>, scalar_prefetch = 0 : i64, scratch_operands = 0 : i64, tpu.core_type = #tpu.core_type<tc>, window_params = [{transform_indices = @transform_0, window_bounds = array<i64: 8, 128>}, {transform_indices = @transform_1, window_bounds = array<i64: 8, 1>}, {pipeline_mode = #tpu.pipeline_mode<synchronous>, transform_indices = @transform_2, window_bounds = array<i64: 128, 128>}, {pipeline_mode = #tpu.pipeline_mode<synchronous>, transform_indices = @transform_3, window_bounds = array<i64: 1, 128>}, {transform_indices = @transform_4, window_bounds = array<i64: 8, 1>}]} {
    %c0 = arith.constant 0 : index
    %c0_0 = arith.constant 0 : index
    %0 = vector.load %arg1[%c0, %c0_0] : memref<8x128xf32, #tpu.memory_space<vmem>>, vector<8x128xf32>
    %c0_1 = arith.constant 0 : index
    %c0_2 = arith.constant 0 : index
    %1 = vector.load %arg2[%c0_1, %c0_2] : memref<8x1xi32, #tpu.memory_space<vmem>>, vector<8x1xi32>
    %2 = arith.mulf %0, %0 : vector<8x128xf32>
    %cst = arith.constant dense<0.000000e+00> : vector<8xf32>
    %3 = vector.multi_reduction <add>, %2, %cst [1] : vector<8x128xf32> to vector<8xf32>
    %4 = vector.shape_cast %3 : vector<8xf32> to vector<8x1xf32>
    %cst_3 = arith.constant 9.99999996E-13 : f32
    %5 = vector.broadcast %cst_3 : f32 to vector<8x1xf32>
    %6 = arith.addf %4, %5 : vector<8x1xf32>
    %7 = math.rsqrt %6 : vector<8x1xf32>
    %8 = vector.broadcast %7 : vector<8x1xf32> to vector<8x128xf32>
    %9 = arith.mulf %0, %8 : vector<8x128xf32>
    %10 = arith.truncf %9 : vector<8x128xf32> to vector<8x128xbf16>
    %c0_4 = arith.constant 0 : index
    %c0_5 = arith.constant 0 : index
    %11 = vector.load %arg3[%c0_4, %c0_5] : memref<128x128xbf16, #tpu.memory_space<vmem>>, vector<128x128xbf16>
    %cst_6 = arith.constant dense<0.000000e+00> : vector<8x128xf32>
    %12 = tpu.matmul %10, %11, %cst_6 {dimension_numbers = #tpu.dot_dimension_numbers<[1], [1], [0], [0], [0, 0, 1, 0], [], []>} : vector<8x128xbf16>, vector<128x128xbf16>, vector<8x128xf32> -> vector<8x128xf32>
    %c0_7 = arith.constant 0 : index
    %c0_8 = arith.constant 0 : index
    %13 = vector.load %arg4[%c0_7, %c0_8] : memref<1x128xf32, #tpu.memory_space<vmem>>, vector<1x128xf32>
    %14 = vector.broadcast %13 : vector<1x128xf32> to vector<8x128xf32>
    %15 = arith.addf %12, %14 : vector<8x128xf32>
    %cst_9 = arith.constant dense<0xFF800000> : vector<8xf32>
    %16 = vector.multi_reduction <maximumf>, %15, %cst_9 [1] : vector<8x128xf32> to vector<8xf32>
    %17 = vector.shape_cast %16 : vector<8xf32> to vector<8x1xf32>
    %18 = vector.broadcast %17 : vector<8x1xf32> to vector<8x128xf32>
    %19 = arith.subf %15, %18 : vector<8x128xf32>
    %20 = math.exp %19 : vector<8x128xf32>
    %cst_10 = arith.constant dense<0.000000e+00> : vector<8xf32>
    %21 = vector.multi_reduction <add>, %20, %cst_10 [1] : vector<8x128xf32> to vector<8xf32>
    %22 = vector.shape_cast %21 : vector<8xf32> to vector<8x1xf32>
    %23 = math.log %22 : vector<8x1xf32>
    %24 = arith.addf %23, %17 : vector<8x1xf32>
    %25 = tpu.iota {dimensions = array<i32: 1>} : vector<8x128xi32>
    %26 = vector.broadcast %1 : vector<8x1xi32> to vector<8x128xi32>
    %27 = arith.cmpi eq, %25, %26 : vector<8x128xi32>
    %cst_11 = arith.constant 0.000000e+00 : f32
    %28 = vector.broadcast %cst_11 : f32 to vector<8x128xf32>
    %29 = arith.select %27, %15, %28 : vector<8x128xi1>, vector<8x128xf32>
    %cst_12 = arith.constant dense<0.000000e+00> : vector<8xf32>
    %30 = vector.multi_reduction <add>, %29, %cst_12 [1] : vector<8x128xf32> to vector<8xf32>
    %31 = vector.shape_cast %30 : vector<8xf32> to vector<8x1xf32>
    %32 = arith.subf %24, %31 : vector<8x1xf32>
    %c0_13 = arith.constant 0 : index
    %c0_14 = arith.constant 0 : index
    %33 = vector.load %arg5[%c0_13, %c0_14] : memref<8x1xf32, #tpu.memory_space<vmem>>, vector<8x1xf32>
    tpu.vector_store %arg5[%c0_13, %c0_14], %32 {strides = array<i32>} : memref<8x1xf32, #tpu.memory_space<vmem>>, vector<8x1xf32>,
    return
  }
  func.func @transform_0(%arg0: i32) -> (i32, i32) {
    %c0_i32 = arith.constant 0 : i32
    %c0_i32_0 = arith.constant 0 : i32
    return %arg0, %c0_i32 : i32, i32
  }
  func.func @transform_1(%arg0: i32) -> (i32, i32) {
    %c0_i32 = arith.constant 0 : i32
    %c0_i32_0 = arith.constant 0 : i32
    return %arg0, %c0_i32 : i32, i32
  }
  func.func @transform_2(%arg0: i32) -> (i32, i32) {
    %c0_i32 = arith.constant 0 : i32
    %c0_i32_0 = arith.constant 0 : i32
    %c0_i32_1 = arith.constant 0 : i32
    return %c0_i32, %c0_i32_0 : i32, i32
  }
  func.func @transform_3(%arg0: i32) -> (i32, i32) {
    %c0_i32 = arith.constant 0 : i32
    %c0_i32_0 = arith.constant 0 : i32
    %c0_i32_1 = arith.constant 0 : i32
    return %c0_i32, %c0_i32_0 : i32, i32
  }
  func.func @transform_4(%arg0: i32) -> (i32, i32) {
    %c0_i32 = arith.constant 0 : i32
    %c0_i32_0 = arith.constant 0 : i32
    return %arg0, %c0_i32 : i32, i32
  }
}

</mosaic_0001>

<llo_original>
// kernel: tpu_custom_call.1
$region0: #{tpu_custom_call.1}
  #allocation0 [shape = 'u32[]', space=smem, size = 0x4, offset = 0x4, fixed_abs, tag = 'smem constant byte address 0x4 - core index']
  #allocation1 [shape = 'u32[72,128]{1,0:T(1,128)}', space=vmem, size = 0x9000, scoped, tag = 'internal scratch']
  %s0 = inlined_call_operand.vmem [shape: f32[8,128], index: 0, kind: input, shape index: {}]
  %s1 = inlined_call_operand.vmem [shape: s32[8,1], index: 1, kind: input, shape index: {}]
  %s2 = inlined_call_operand.hbm [shape: bf16[128,128], index: 2, kind: input, shape index: {}]
  %s3 = inlined_call_operand.vmem [shape: f32[1,128], index: 3, kind: input, shape index: {}]
  %s4 = inlined_call_operand.vmem [shape: f32[8,1], index: 4, kind: output, shape index: {}]
  %s5 = sld [smem:[#allocation0]]
  $region30: #{tpu_custom_call.1} parent=0
    _
  %s7 = ssub.s32 1, %s5
  %s8 = scalar_select 0, %s7, %s5
  $region1: #{tpu_custom_call.1} parent=0
    #allocation2 [shape = 'u8[32768]{0}', space=vmem, size = 0x8000, scoped, tag = 'input window, operand 2, single buffered']
    #allocation3 [shape = 's32[1]{0}', space=sflag, size = 0x4, scoped, tag = 'scoped memory for tpu_custom_call.1']
    %9 = vsyncpa [#allocation3], 0
    // Predicated region
    $region2: #{tpu_custom_call.1} parent=1 // pred_check
      _
    $region3: #{tpu_custom_call.1} parent=1 // pred_check_branch
      %11 = sbr.rel (0) target = $region5
    $region4: #{tpu_custom_call.1} parent=1 // pred_region
      _
    $region5: #{tpu_custom_call.1} parent=1 // pred_fallthru
      _
    // Predicated region
    $region6: #{tpu_custom_call.1} parent=1 // pred_check
      _
    $region7: #{tpu_custom_call.1} parent=1 // pred_check_branch
      %13 = sbr.rel (0) target = $region9
    $region8: #{tpu_custom_call.1} parent=1 // pred_region
      _
    $region9: #{tpu_custom_call.1} parent=1 // pred_fallthru
      _
    // Predicated region
    $region10: #{tpu_custom_call.1} parent=1 // pred_check
      _
    $region11: #{tpu_custom_call.1} parent=1 // pred_check_branch
      %15 = sbr.rel (0) target = $region13
    $region12: #{tpu_custom_call.1} parent=1 // pred_region
      %17 = vsyncadd [#allocation3], 0
      %s18 = sshll.u32 %s2, 4
      %s19 = int_to_ptr.hbm [resolvable:$true] %s18
      %s20 = sshll.u32 [#allocation2], 4
      %s21 = int_to_ptr.vmem [resolvable:$true] %s20
      %26 = dma.hbm_to_vmem [thread:$0]  %s19, 1024, %s21, [#allocation3], 64, 64, 4
    $region13: #{tpu_custom_call.1} parent=1 // pred_fallthru
      _
    // Predicated region
    $region14: #{tpu_custom_call.1} parent=1 // pred_check
      _
    $region15: #{tpu_custom_call.1} parent=1 // pred_check_branch
      %28 = sbr.rel (0) target = $region17
    $region16: #{tpu_custom_call.1} parent=1 // pred_region
      _
    $region17: #{tpu_custom_call.1} parent=1 // pred_fallthru
      _
    // Predicated region
    $region18: #{tpu_custom_call.1} parent=1 // pred_check
      _
    $region19: #{tpu_custom_call.1} parent=1 // pred_check_branch
      %30 = sbr.rel (0) target = $region21
    $region20: #{tpu_custom_call.1} parent=1 // pred_region
      %32 = dma.done [#allocation3], 1024
    $region21: #{tpu_custom_call.1} parent=1 // pred_fallthru
      _
    %v33 = vld [vmem:[%s0] sm:$0xff]
    %v34 = vld [vmem:[%s1] sm:$0xff]
    %v35 = vmul.f32 %v33, %v33
    %36 = vadd.xlane.f32.xlu0 %v35
    %v37 = vpop.xlane.xlu0 %36
    %v38 = vadd.f32 %v37, 1e-12
    %v39 = vrsqrt.pop %v38
    %v40 = vmul.f32 %v39, %v38
    %v41 = vmul.f32 %v40, %v39
    %v42 = vmul.f32 0.5, %v41
    %v43 = vsub.f32 1.5, %v42
    %v44 = vmul.f32 %v39, %v43
    %vm45 = vweird.f32 %v38
    %vm46 = vweird.f32 %v39
    %vm47 = vmor %vm45, %vm46
    %v48 = vsel %vm47, %v39, %v44
    %v49 = vmul.f32 %v33, %v48
    %v50 = vpack.c.bf16 %v49, %v49
    %v51 = vld [vmem:[#allocation2] sm:$0xf]
    %v52 = vld [vmem:[#allocation2 + $0x4] sm:$0xf]
    %v53 = vld [vmem:[#allocation2 + $0x8] sm:$0xf]
    %v54 = vld [vmem:[#allocation2 + $0xc] sm:$0xf]
    %v55 = vld [vmem:[#allocation2 + $0x10] sm:$0xf]
    %v56 = vld [vmem:[#allocation2 + $0x14] sm:$0xf]
    %v57 = vld [vmem:[#allocation2 + $0x18] sm:$0xf]
    %v58 = vld [vmem:[#allocation2 + $0x1c] sm:$0xf]
    %v59 = vld [vmem:[#allocation2 + $0x20] sm:$0xf]
    %v60 = vld [vmem:[#allocation2 + $0x24] sm:$0xf]
    %v61 = vld [vmem:[#allocation2 + $0x28] sm:$0xf]
    %v62 = vld [vmem:[#allocation2 + $0x2c] sm:$0xf]
    %v63 = vld [vmem:[#allocation2 + $0x30] sm:$0xf]
    %v64 = vld [vmem:[#allocation2 + $0x34] sm:$0xf]
    %v65 = vld [vmem:[#allocation2 + $0x38] sm:$0xf]
    %v66 = vld [vmem:[#allocation2 + $0x3c] sm:$0xf]
    %v67 = vld [vmem:[%s3] sm:$0x1]
    %v69 = vperm.slane %v67, 0
    %v87 = vunpack.c.l.b16 %v51
    %v88 = vunpack.c.l.b16 %v52
    %v89 = vunpack.c.l.b16 %v53
    %v90 = vunpack.c.l.b16 %v54
    %v91 = vunpack.c.l.b16 %v55
    %v92 = vunpack.c.l.b16 %v56
    %v93 = vunpack.c.l.b16 %v57
    %v94 = vunpack.c.l.b16 %v58
    %v95 = vunpack.c.l.b16 %v59
    %v96 = vunpack.c.l.b16 %v60
    %v97 = vunpack.c.l.b16 %v61
    %v98 = vunpack.c.l.b16 %v62
    %v99 = vunpack.c.l.b16 %v63
    %v100 = vunpack.c.l.b16 %v64
    %v101 = vunpack.c.l.b16 %v65
    %v102 = vunpack.c.l.b16 %v66
    %v103 = vpack.c.b16 %v88, %v87
    %v104 = vpack.c.b16 %v90, %v89
    %v105 = vpack.c.b16 %v92, %v91
    %v106 = vpack.c.b16 %v94, %v93
    %v107 = vpack.c.b16 %v96, %v95
    %v108 = vpack.c.b16 %v98, %v97
    %v109 = vpack.c.b16 %v100, %v99
    %v110 = vpack.c.b16 %v102, %v101
    %119 = vmatpush.bf16.xpose.msra.mxu0 %v110
    %120 = vmatpush.bf16.xpose.msra.mxu0 %v109
    %121 = vmatpush.bf16.xpose.msra.mxu0 %v108
    %122 = vmatpush.bf16.xpose.msra.mxu0 %v107
    %123 = vmatpush.bf16.xpose.msra.mxu0 %v106
    %124 = vmatpush.bf16.xpose.msra.mxu0 %v105
    %125 = vmatpush.bf16.xpose.msra.mxu0 %v104
    %126 = vmatpush.bf16.xpose.msra.mxu0 %v103
    %127 = vmatmul.bf16.gmra.mxu0 %v50
    %v128 = vpop.f32.mrf.mxu0
    %v129 = vadd.f32 %v69, %v128
    %v130 = vpop.f32.mrf.mxu0
    %131 = vdwg.mxu0
    %132 = vmax.xlane.f32.xlu0 %v129
    %v133 = vpop.xlane.xlu0 %132
    %v134 = vsub.f32 %v129, %v133
    %v135 = vmul.f32 %v134, 1.442695
    %v136 = vpow.pop %v135
    %137 = vadd.xlane.f32.xlu0 %v136
    %v138 = vpop.xlane.xlu0 %137
    %v139 = vlog2.pop %v138
    %v140 = vmul.f32 %v139, 0.6931472
    %v141 = vadd.f32 %v140, %v133
    %v142 = vlaneseq
    %v143 = vand.u32 %v142, 127
    %144 = vset.pattern.permute.xlu0 0
    %145 = vperm.xlu0 %144, %v34
    %v146 = vpop.permute.xlu0 %145
    %vm147 = vcmp.eq.s32.totalorder %v143, %v146
    %v148 = vsel %vm147, %v129, 0.0
    %149 = vadd.xlane.f32.xlu0 %v148
    %v150 = vpop.xlane.xlu0 %149
    %v151 = vsub.f32 %v141, %v150
    %vm152 = vcmask 7168
    %153 = vst.msk [vmem:[%s4] sm:$0xff] %vm152, %v151
    // Predicated region
    $region22: #{tpu_custom_call.1} parent=1 // pred_check
      _
    $region23: #{tpu_custom_call.1} parent=1 // pred_check_branch
      %155 = sbr.rel (0) target = $region25
    $region24: #{tpu_custom_call.1} parent=1 // pred_region
      _
    $region25: #{tpu_custom_call.1} parent=1 // pred_fallthru
      _
    // Predicated region
    $region26: #{tpu_custom_call.1} parent=1 // pred_check
      _
    $region27: #{tpu_custom_call.1} parent=1 // pred_check_branch
      %157 = sbr.rel (0) target = $region29
    $region28: #{tpu_custom_call.1} parent=1 // pred_region
      _
    $region29: #{tpu_custom_call.1} parent=1 // pred_fallthru
      _
    %158 = vsyncpa [#allocation3], 1

</llo_original>
